<compile_context>
chip_gen: v5e
topology: v5e:2x2
jax: 0.10.0
libtpu: 0.0.40
codegen_flags: <defaults>
</compile_context>

<pallas_src>
import functools

import jax
import jax.numpy as jnp
from jax.experimental import pallas as pl
from jax.experimental.pallas import tpu as pltpu

HIDDEN = 30          # fc1 output size from the PyTorch module
LANE = 128           # TPU lane width (lane-dense output slab)
SUBLANE = 8


def _round_up(n, m):
    return ((n + m - 1) // m) * m


def _mlp_kernel(x_ref, w1_ref, b1_ref, w2_ref, b2_ref, o_ref):
    # One batch tile, fully VMEM-resident: matmul -> bias -> ReLU -> matmul -> bias.
    x = x_ref[...]                                                     # [TB, D_pad]
    h = jnp.dot(x, w1_ref[...], preferred_element_type=jnp.float32)   # [TB, H_pad] f32
    h = jnp.maximum(h + b1_ref[...], 0.0)                             # bias + ReLU (VPU)
    q = jnp.dot(h.astype(w2_ref.dtype), w2_ref[...],
                preferred_element_type=jnp.float32)                   # [TB, A_pad] f32
    q = q + b2_ref[...]
    o_ref[...] = q.astype(o_ref.dtype)                                # lane-dense store


def init_params(key, input_size, nb_action, hidden=HIDDEN, dtype=jnp.float32):
    """PyTorch nn.Linear-style init: U(-1/sqrt(fan_in), 1/sqrt(fan_in)).
    Returns logical (unpadded) params, weights stored as [in, out]."""
    k1, k2, k3, k4 = jax.random.split(key, 4)
    bound1 = 1.0 / jnp.sqrt(jnp.float32(input_size))
    bound2 = 1.0 / jnp.sqrt(jnp.float32(hidden))
    w1 = jax.random.uniform(k1, (input_size, hidden), dtype, -bound1, bound1)
    b1 = jax.random.uniform(k2, (1, hidden), dtype, -bound1, bound1)
    w2 = jax.random.uniform(k3, (hidden, nb_action), dtype, -bound2, bound2)
    b2 = jax.random.uniform(k4, (1, nb_action), dtype, -bound2, bound2)
    return w1, b1, w2, b2


def pad_params(params):
    """Host-side, one-time zero padding to TPU-friendly shapes.
    D_in -> mult of 8, hidden 30 -> 32, nb_action -> 128 (lane-dense output)."""
    w1, b1, w2, b2 = params
    d_in, h = w1.shape
    a = w2.shape[1]
    d_pad = _round_up(d_in, SUBLANE)
    h_pad = _round_up(h, SUBLANE)           # 30 -> 32
    a_pad = LANE                            # lane-dense output slab

    w1_p = jnp.zeros((d_pad, h_pad), w1.dtype).at[:d_in, :h].set(w1)
    b1_p = jnp.zeros((1, h_pad), b1.dtype).at[:, :h].set(b1)
    w2_p = jnp.zeros((h_pad, a_pad), w2.dtype).at[:h, :a].set(w2)
    b2_p = jnp.zeros((1, a_pad), b2.dtype).at[:, :a].set(b2)
    return (w1_p, b1_p, w2_p, b2_p), (d_in, a)


@functools.partial(jax.jit, static_argnames=("nb_action", "input_size", "block_b"))
def network_forward(state, w1, b1, w2, b2, *, input_size, nb_action, block_b=2048):
    """state: [B, input_size]; padded params from pad_params -> q_values [B, nb_action]."""
    B = state.shape[0]
    d_pad, h_pad = w1.shape
    a_pad = w2.shape[1]

    # Tile size: large enough to amortize the ~0.35us per-step overhead, small
    # enough that double-buffered (state + output) tiles stay well under the v7x
    # 32 MiB scoped-VMEM default.  Small batches collapse to one aligned tile.
    tb = min(block_b, _round_up(B, SUBLANE))
    b_pad = _round_up(B, tb)

    # Zero-pad batch rows and feature columns (zeros are exact: padded rows/cols
    # never reach the returned q_values).
    x = jnp.pad(state, ((0, b_pad - B), (0, d_pad - input_size)))

    grid = (b_pad // tb,)
    out = pl.pallas_call(
        _mlp_kernel,
        out_shape=jax.ShapeDtypeStruct((b_pad, a_pad), state.dtype),
        grid=grid,
        in_specs=[
            pl.BlockSpec((tb, d_pad), lambda i: (i, 0)),     # state: tiled over batch
            pl.BlockSpec((d_pad, h_pad), lambda i: (0, 0)),  # fc1 W: pinned in VMEM
            pl.BlockSpec((1, h_pad), lambda i: (0, 0)),      # fc1 b: pinned
            pl.BlockSpec((h_pad, a_pad), lambda i: (0, 0)),  # fc2 W: pinned
            pl.BlockSpec((1, a_pad), lambda i: (0, 0)),      # fc2 b: pinned
        ],
        out_specs=pl.BlockSpec((tb, a_pad), lambda i: (i, 0)),
        compiler_params=pltpu.CompilerParams(
            dimension_semantics=("parallel",),               # megacore / v7x 2-TC split
        ),
    )(x, w1, b1, w2, b2)

    return out[:B, :nb_action]


def _reference(state, params):
    w1, b1, w2, b2 = params
    return jnp.maximum(state @ w1 + b1, 0.0) @ w2 + b2


if __name__ == "__main__":
    key = jax.random.PRNGKey(0)
    k_params, k_small, k_big = jax.random.split(key, 3)

    input_size = 4     # e.g. sensor signals + orientation style state
    nb_action = 3

    params = init_params(k_params, input_size, nb_action)
    padded_params, _ = pad_params(params)

    # --- small-shape check (matches the module's typical select_action batch) ---
    state_small = jax.random.normal(k_small, (2, input_size), jnp.float32)
    q_small = network_forward(state_small, *padded_params,
                              input_size=input_size, nb_action=nb_action)
    q_small = jax.block_until_ready(q_small)
    ref_small = _reference(state_small, params)
    assert q_small.shape == (2, nb_action)
    assert jnp.allclose(q_small, ref_small, atol=1e-5, rtol=1e-5)

    # --- multi-tile check: exercises the batch grid / pipelined path ---
    state_big = jax.random.normal(k_big, (256, input_size), jnp.float32)
    q_big = network_forward(state_big, *padded_params,
                            input_size=input_size, nb_action=nb_action, block_b=128)
    q_big = jax.block_until_ready(q_big)
    ref_big = _reference(state_big, params)
    assert q_big.shape == (256, nb_action)
    assert jnp.allclose(q_big, ref_big, atol=1e-5, rtol=1e-5)

    # TODO(synk): for production DQN, fuse the downstream softmax/argmax action
    # selection (or TD-target gather) into this kernel so the narrow Q output
    # never round-trips HBM; at batch<=2 a standalone kernel is launch-bound.

    print("KERNEL_OK")
</pallas_src>

<mosaic_0001>
module attributes {stable_mosaic.version = 11 : i64} {
  func.func @_mlp_kernel(%arg0: i32, %arg1: memref<8x8xf32, #tpu.memory_space<vmem>>, %arg2: memref<8x32xf32, #tpu.memory_space<vmem>>, %arg3: memref<1x32xf32, #tpu.memory_space<vmem>>, %arg4: memref<32x128xf32, #tpu.memory_space<vmem>>, %arg5: memref<1x128xf32, #tpu.memory_space<vmem>>, %arg6: memref<8x128xf32, #tpu.memory_space<vmem>>) attributes {dimension_semantics = [#tpu.dimension_semantics<parallel>], iteration_bounds = array<i64: 1>, scalar_prefetch = 0 : i64, scratch_operands = 0 : i64, tpu.core_type = #tpu.core_type<tc>, window_params = [{transform_indices = @transform_0, window_bounds = array<i64: 8, 8>}, {pipeline_mode = #tpu.pipeline_mode<synchronous>, transform_indices = @transform_1, window_bounds = array<i64: 8, 32>}, {pipeline_mode = #tpu.pipeline_mode<synchronous>, transform_indices = @transform_2, window_bounds = array<i64: 1, 32>}, {pipeline_mode = #tpu.pipeline_mode<synchronous>, transform_indices = @transform_3, window_bounds = array<i64: 32, 128>}, {pipeline_mode = #tpu.pipeline_mode<synchronous>, transform_indices = @transform_4, window_bounds = array<i64: 1, 128>}, {transform_indices = @transform_5, window_bounds = array<i64: 8, 128>}]} {
    %c0 = arith.constant 0 : index
    %c0_0 = arith.constant 0 : index
    %0 = vector.load %arg1[%c0, %c0_0] : memref<8x8xf32, #tpu.memory_space<vmem>>, vector<8x8xf32>
    %c0_1 = arith.constant 0 : index
    %c0_2 = arith.constant 0 : index
    %1 = vector.load %arg2[%c0_1, %c0_2] : memref<8x32xf32, #tpu.memory_space<vmem>>, vector<8x32xf32>
    %cst = arith.constant dense<0.000000e+00> : vector<8x32xf32>
    %2 = tpu.matmul %0, %1, %cst {dimension_numbers = #tpu.dot_dimension_numbers<[1], [0], [0], [1], [0, 0, 1, 1], [], []>} : vector<8x8xf32>, vector<8x32xf32>, vector<8x32xf32> -> vector<8x32xf32>
    %c0_3 = arith.constant 0 : index
    %c0_4 = arith.constant 0 : index
    %3 = vector.load %arg3[%c0_3, %c0_4] : memref<1x32xf32, #tpu.memory_space<vmem>>, vector<1x32xf32>
    %4 = vector.broadcast %3 : vector<1x32xf32> to vector<8x32xf32>
    %5 = arith.addf %2, %4 : vector<8x32xf32>
    %cst_5 = arith.constant 0.000000e+00 : f32
    %6 = vector.broadcast %cst_5 : f32 to vector<8x32xf32>
    %7 = arith.maximumf %5, %6 : vector<8x32xf32>
    %c0_6 = arith.constant 0 : index
    %c0_7 = arith.constant 0 : index
    %8 = vector.load %arg4[%c0_6, %c0_7] : memref<32x128xf32, #tpu.memory_space<vmem>>, vector<32x128xf32>
    %cst_8 = arith.constant dense<0.000000e+00> : vector<8x128xf32>
    %9 = tpu.matmul %7, %8, %cst_8 {dimension_numbers = #tpu.dot_dimension_numbers<[1], [0], [0], [1], [0, 0, 1, 1], [], []>} : vector<8x32xf32>, vector<32x128xf32>, vector<8x128xf32> -> vector<8x128xf32>
    %c0_9 = arith.constant 0 : index
    %c0_10 = arith.constant 0 : index
    %10 = vector.load %arg5[%c0_9, %c0_10] : memref<1x128xf32, #tpu.memory_space<vmem>>, vector<1x128xf32>
    %11 = vector.broadcast %10 : vector<1x128xf32> to vector<8x128xf32>
    %12 = arith.addf %9, %11 : vector<8x128xf32>
    %c0_11 = arith.constant 0 : index
    %c0_12 = arith.constant 0 : index
    %13 = vector.load %arg6[%c0_11, %c0_12] : memref<8x128xf32, #tpu.memory_space<vmem>>, vector<8x128xf32>
    tpu.vector_store %arg6[%c0_11, %c0_12], %12 {strides = array<i32>} : memref<8x128xf32, #tpu.memory_space<vmem>>, vector<8x128xf32>,
    return
  }
  func.func @transform_0(%arg0: i32) -> (i32, i32) {
    %c0_i32 = arith.constant 0 : i32
    %c0_i32_0 = arith.constant 0 : i32
    return %arg0, %c0_i32 : i32, i32
  }
  func.func @transform_1(%arg0: i32) -> (i32, i32) {
    %c0_i32 = arith.constant 0 : i32
    %c0_i32_0 = arith.constant 0 : i32
    %c0_i32_1 = arith.constant 0 : i32
    return %c0_i32, %c0_i32_0 : i32, i32
  }
  func.func @transform_2(%arg0: i32) -> (i32, i32) {
    %c0_i32 = arith.constant 0 : i32
    %c0_i32_0 = arith.constant 0 : i32
    %c0_i32_1 = arith.constant 0 : i32
    return %c0_i32, %c0_i32_0 : i32, i32
  }
  func.func @transform_3(%arg0: i32) -> (i32, i32) {
    %c0_i32 = arith.constant 0 : i32
    %c0_i32_0 = arith.constant 0 : i32
    %c0_i32_1 = arith.constant 0 : i32
    return %c0_i32, %c0_i32_0 : i32, i32
  }
  func.func @transform_4(%arg0: i32) -> (i32, i32) {
    %c0_i32 = arith.constant 0 : i32
    %c0_i32_0 = arith.constant 0 : i32
    %c0_i32_1 = arith.constant 0 : i32
    return %c0_i32, %c0_i32_0 : i32, i32
  }
  func.func @transform_5(%arg0: i32) -> (i32, i32) {
    %c0_i32 = arith.constant 0 : i32
    %c0_i32_0 = arith.constant 0 : i32
    return %arg0, %c0_i32 : i32, i32
  }
}

</mosaic_0001>

<llo_original>
// kernel: network_forward.1
$region0: #{network_forward.1}
  #allocation0 [shape = 'u32[]', space=smem, size = 0x4, offset = 0x4, fixed_abs, tag = 'smem constant byte address 0x4 - core index']
  #allocation1 [shape = 'u32[72,128]{1,0:T(1,128)}', space=vmem, size = 0x9000, scoped, tag = 'internal scratch']
  %s0 = inlined_call_operand.vmem [shape: f32[8,8], index: 0, kind: input, shape index: {}]
  %s1 = inlined_call_operand.vmem [shape: f32[8,32], index: 1, kind: input, shape index: {}]
  %s2 = inlined_call_operand.vmem [shape: f32[1,32], index: 2, kind: input, shape index: {}]
  %s3 = inlined_call_operand.hbm [shape: f32[32,128], index: 3, kind: input, shape index: {}]
  %s4 = inlined_call_operand.vmem [shape: f32[1,128], index: 4, kind: input, shape index: {}]
  %s5 = inlined_call_operand.vmem [shape: f32[8,128], index: 5, kind: output, shape index: {}]
  %s6 = sld [smem:[#allocation0]]
  $region34: #{network_forward.1} parent=0
    _
  %s8 = ssub.s32 1, %s6
  %s9 = scalar_select 0, %s8, %s6
  $region1: #{network_forward.1} parent=0
    #allocation2 [shape = 'u8[16384]{0}', space=vmem, size = 0x4000, scoped, tag = 'input window, operand 3, single buffered']
    #allocation3 [shape = 's32[1]{0}', space=sflag, size = 0x4, scoped, tag = 'scoped memory for network_forward.1']
    %10 = vsyncpa [#allocation3], 0
    // Predicated region
    $region2: #{network_forward.1} parent=1 // pred_check
      _
    $region3: #{network_forward.1} parent=1 // pred_check_branch
      %12 = sbr.rel (0) target = $region5
    $region4: #{network_forward.1} parent=1 // pred_region
      _
    $region5: #{network_forward.1} parent=1 // pred_fallthru
      _
    // Predicated region
    $region6: #{network_forward.1} parent=1 // pred_check
      _
    $region7: #{network_forward.1} parent=1 // pred_check_branch
      %14 = sbr.rel (0) target = $region9
    $region8: #{network_forward.1} parent=1 // pred_region
      _
    $region9: #{network_forward.1} parent=1 // pred_fallthru
      _
    // Predicated region
    $region10: #{network_forward.1} parent=1 // pred_check
      _
    $region11: #{network_forward.1} parent=1 // pred_check_branch
      %16 = sbr.rel (0) target = $region13
    $region12: #{network_forward.1} parent=1 // pred_region
      _
    $region13: #{network_forward.1} parent=1 // pred_fallthru
      _
    // Predicated region
    $region14: #{network_forward.1} parent=1 // pred_check
      _
    $region15: #{network_forward.1} parent=1 // pred_check_branch
      %18 = sbr.rel (0) target = $region17
    $region16: #{network_forward.1} parent=1 // pred_region
      %20 = vsyncadd [#allocation3], 0
      %s21 = sshll.u32 %s3, 4
      %s22 = int_to_ptr.hbm [resolvable:$true] %s21
      %s23 = sshll.u32 [#allocation2], 4
      %s24 = int_to_ptr.vmem [resolvable:$true] %s23
      %29 = dma.hbm_to_vmem [thread:$0]  %s22, 512, %s24, [#allocation3], 128, 128, 8
    $region17: #{network_forward.1} parent=1 // pred_fallthru
      _
    // Predicated region
    $region18: #{network_forward.1} parent=1 // pred_check
      _
    $region19: #{network_forward.1} parent=1 // pred_check_branch
      %31 = sbr.rel (0) target = $region21
    $region20: #{network_forward.1} parent=1 // pred_region
      _
    $region21: #{network_forward.1} parent=1 // pred_fallthru
      _
    // Predicated region
    $region22: #{network_forward.1} parent=1 // pred_check
      _
    $region23: #{network_forward.1} parent=1 // pred_check_branch
      %33 = sbr.rel (0) target = $region25
    $region24: #{network_forward.1} parent=1 // pred_region
      %35 = dma.done [#allocation3], 512
    $region25: #{network_forward.1} parent=1 // pred_fallthru
      _
    %v36 = vld [vmem:[%s0] sm:$0xff]
    %v37 = vld [vmem:[%s1] sm:$0xff]
    %v38 = vld [vmem:[%s2] sm:$0x1]
    %v40 = vperm.slane %v38, 0
    %vm42 = vcmask 64512
    %v44 = vsel %vm42, %v36, 0
    %46 = vmatpush.msra.mxu0 0.0
    %47 = vmatpush.msra.mxu0 0.0
    %48 = vmatpush.msra.mxu0 0.0
    %49 = vmatpush.msra.mxu0 0.0
    %50 = vmatpush.msra.mxu0 0.0
    %51 = vmatpush.msra.mxu0 0.0
    %52 = vmatpush.msra.mxu0 0.0
    %53 = vmatpush.msra.mxu0 0.0
    %54 = vmatpush.msra.mxu0 0.0
    %55 = vmatpush.msra.mxu0 0.0
    %56 = vmatpush.msra.mxu0 0.0
    %57 = vmatpush.msra.mxu0 0.0
    %58 = vmatpush.msra.mxu0 0.0
    %59 = vmatpush.msra.mxu0 0.0
    %60 = vmatpush.msra.mxu0 0.0
    %61 = vmatpush.msra.mxu0 %v37
    %62 = vmatmul.f32.gmra.mxu0 %v44
    %v63 = vpop.f32.mrf.mxu0
    %v64 = vadd.f32 %v40, %v63
    %65 = vdwg.mxu0
    %v66 = vmax.f32 %v64, 0.0
    %v67 = vld [vmem:[#allocation2] sm:$0xff]
    %v68 = vld [vmem:[#allocation2 + $0x8] sm:$0xff]
    %v69 = vld [vmem:[#allocation2 + $0x10] sm:$0xff]
    %v70 = vld [vmem:[#allocation2 + $0x18] sm:$0xff]
    %v71 = vld [vmem:[%s4] sm:$0x1]
    %v73 = vperm.slane %v71, 0
    %vm75 = vcmask 261120
    %v77 = vsel %vm75, %v66, 0
    %79 = vmatpush.msra.mxu0 0.0
    %80 = vmatpush.msra.mxu0 0.0
    %81 = vmatpush.msra.mxu0 0.0
    %82 = vmatpush.msra.mxu0 0.0
    %83 = vmatpush.msra.mxu0 0.0
    %84 = vmatpush.msra.mxu0 0.0
    %85 = vmatpush.msra.mxu0 0.0
    %86 = vmatpush.msra.mxu0 0.0
    %87 = vmatpush.msra.mxu0 0.0
    %88 = vmatpush.msra.mxu0 0.0
    %89 = vmatpush.msra.mxu0 0.0
    %90 = vmatpush.msra.mxu0 0.0
    %91 = vmatpush.msra.mxu0 %v70
    %92 = vmatpush.msra.mxu0 %v69
    %93 = vmatpush.msra.mxu0 %v68
    %94 = vmatpush.msra.mxu0 %v67
    %95 = vmatmul.f32.gmra.mxu0 %v77
    %v96 = vpop.f32.mrf.mxu0
    %v97 = vadd.f32 %v73, %v96
    %98 = vdwg.mxu0
    %99 = vst [vmem:[%s5] sm:$0xff] %v97
    // Predicated region
    $region26: #{network_forward.1} parent=1 // pred_check
      _
    $region27: #{network_forward.1} parent=1 // pred_check_branch
      %101 = sbr.rel (0) target = $region29
    $region28: #{network_forward.1} parent=1 // pred_region
      _
    $region29: #{network_forward.1} parent=1 // pred_fallthru
      _
    // Predicated region
    $region30: #{network_forward.1} parent=1 // pred_check
      _
    $region31: #{network_forward.1} parent=1 // pred_check_branch
      %103 = sbr.rel (0) target = $region33
    $region32: #{network_forward.1} parent=1 // pred_region
      _
    $region33: #{network_forward.1} parent=1 // pred_fallthru
      _
    %104 = vsyncpa [#allocation3], 1

</llo_original>
